<compile_context>
chip_gen: v5e
topology: v5e:2x2
jax: 0.10.0
libtpu: 0.0.40
codegen_flags: <defaults>
</compile_context>

<pallas_src>
import functools

import jax
import jax.numpy as jnp
from jax import lax
from jax.experimental import pallas as pl
from jax.experimental.pallas import tpu as pltpu

# Large finite negative instead of -inf so the online-softmax recurrence never hits
# inf - inf = NaN; exp(_MASK_VALUE - m) underflows to exactly 0 whenever a real key exists.
_MASK_VALUE = -1e30
_LANES = 128


def _rep_lanes(stat, n):
    """Broadcast a lane-replicated (rows, 128) statistic to (rows, n)."""
    w = stat.shape[-1]
    if n == w:
        return stat
    if n % w == 0:
        return jnp.tile(stat, (1, n // w))  # lane-aligned copy (replacement for pltpu.repeat)
    return stat[:, :1]                      # small / full-extent fallback (implicit broadcast)


def _init_state(q_ref, m_scr, l_scr, acc_scr, qs_scr, scale):
    m_scr[...] = jnp.full_like(m_scr, -jnp.inf)
    l_scr[...] = jnp.zeros_like(l_scr)
    acc_scr[...] = jnp.zeros_like(acc_scr)
    # Scale Q once per q-tile (Q block is resident across the kv axis).
    qs_scr[...] = q_ref[0] * scale


def _online_softmax_step(q, k_ref, v_ref, mask_ref, m_scr, l_scr, acc_scr):
    k = k_ref[0]                     # (tk, D)
    v = v_ref[0]                     # (tk, Dv_p)
    # s = (Q*scale) @ K^T : contract last dims of both so K is consumed in stored layout.
    s = lax.dot_general(q, k, (((1,), (1,)), ((), ())),
                        preferred_element_type=jnp.float32)        # (tq, tk) f32
    if mask_ref is not None:
        s = jnp.where(mask_ref[0] != 0, _MASK_VALUE, s)

    m_prev = m_scr[...]                                             # (tq, 128)
    row_max = jnp.max(s, axis=-1, keepdims=True)                    # (tq, 1)
    m_new = jnp.maximum(m_prev, row_max)                            # (tq, 128)
    alpha = jnp.exp(m_prev - m_new)                                 # (tq, 128)
    p = jnp.exp(s - _rep_lanes(m_new, s.shape[-1]))                 # (tq, tk) f32
    l_scr[...] = alpha * l_scr[...] + jnp.sum(p, axis=-1, keepdims=True)
    acc_scr[...] = (_rep_lanes(alpha, acc_scr.shape[-1]) * acc_scr[...]
                    + jnp.dot(p.astype(v.dtype), v, preferred_element_type=jnp.float32))
    m_scr[...] = m_new


def _finalize(o_ref, l_scr, acc_scr, guard_zero):
    l = l_scr[...]
    if guard_zero:
        # Fully-masked rows never accumulated: emit 0 instead of NaN (torch would NaN).
        l = jnp.where(l == 0.0, 1.0, l)
    inv = pl.reciprocal(l, approx=True)   # EUP vrcp slot — off the VALU critical path
    o_ref[0] = (acc_scr[...] * _rep_lanes(inv, acc_scr.shape[-1])).astype(o_ref.dtype)


def _attn_kernel_nomask(q_ref, k_ref, v_ref, o_ref,
                        m_scr, l_scr, acc_scr, qs_scr, *, scale):
    kv = pl.program_id(2)

    @pl.when(kv == 0)
    def _():
        _init_state(q_ref, m_scr, l_scr, acc_scr, qs_scr, scale)

    _online_softmax_step(qs_scr[...], k_ref, v_ref, None, m_scr, l_scr, acc_scr)

    @pl.when(kv == pl.num_programs(2) - 1)
    def _():
        _finalize(o_ref, l_scr, acc_scr, guard_zero=False)


def _attn_kernel_masked(binfo_ref, q_ref, k_ref, v_ref, mask_ref, o_ref,
                        m_scr, l_scr, acc_scr, qs_scr, *, scale):
    b, qi, kv = pl.program_id(0), pl.program_id(1), pl.program_id(2)

    @pl.when(kv == 0)
    def _():
        _init_state(q_ref, m_scr, l_scr, acc_scr, qs_scr, scale)

    # Scalar-prefetched per-block flag: 0 = no masked keys, 1 = partial, 2 = all masked.
    info = binfo_ref[(b * pl.num_programs(1) + qi) * pl.num_programs(2) + kv]

    @pl.when(info == 0)  # fully-unmasked block: skip the mask load / where
    def _():
        _online_softmax_step(qs_scr[...], k_ref, v_ref, None, m_scr, l_scr, acc_scr)

    @pl.when(info == 1)  # partially-masked block
    def _():
        _online_softmax_step(qs_scr[...], k_ref, v_ref, mask_ref, m_scr, l_scr, acc_scr)

    # info == 2 (fully-masked block): skip QK^T, exp and all accumulator updates.

    @pl.when(kv == pl.num_programs(2) - 1)
    def _():
        _finalize(o_ref, l_scr, acc_scr, guard_zero=True)


def _pick_tile(dim, candidates):
    for c in candidates:
        if dim >= c and dim % c == 0:
            return c
    return dim  # full-extent block (always legal)


def attention(Q, K, V, mask=None, dk=64, block_q=None, block_k=None,
              vmem_limit_bytes=32 * 1024 * 1024):
    """Scaled dot-product attention matching the PyTorch module semantics.

    Note: like the PyTorch module, the softmax scale uses the caller-supplied `dk`
    (default 64), NOT Q.shape[-1].
    """
    B, Lq, D = Q.shape
    Bk, Lk, Dk = K.shape
    Bv, Lkv, Dv = V.shape
    assert B == Bk == Bv and D == Dk and Lk == Lkv

    has_mask = mask is not None

    # Larger q-tiles cut K/V re-streaming from HBM; per-step VMEM stays at a few MiB.
    tq = block_q or _pick_tile(Lq, (512, 256, 128))
    tk = block_k or _pick_tile(Lk, (256, 128))
    assert Lq % tq == 0 and Lk % tk == 0
    nq, nk = Lq // tq, Lk // tk

    # Lane-dense output stores: pad Dv up to a multiple of 128 (zero columns are inert).
    Dv_p = ((Dv + _LANES - 1) // _LANES) * _LANES
    if Dv_p != Dv:
        V = jnp.pad(V, ((0, 0), (0, 0), (0, Dv_p - Dv)))

    scale = 1.0 / (float(dk) ** 0.5)
    grid = (B, nq, nk)
    out_dtype = Q.dtype

    scratch_shapes = [
        pltpu.VMEM((tq, _LANES), jnp.float32),   # running row max (lane-replicated)
        pltpu.VMEM((tq, _LANES), jnp.float32),   # running denom    (lane-replicated)
        pltpu.VMEM((tq, Dv_p), jnp.float32),     # unnormalized output accumulator
        pltpu.VMEM((tq, D), Q.dtype),            # scaled-Q cache (written once per q-tile)
    ]

    itemsize = jnp.dtype(Q.dtype).itemsize
    bytes_accessed = int((Q.size + K.size + V.size + B * Lq * Dv_p) * itemsize)
    if has_mask:
        bytes_accessed += B * Lq * Lk  # int8 mask
    cost = pl.CostEstimate(flops=2 * B * Lq * Lk * (D + Dv_p),
                           transcendentals=B * Lq * Lk,
                           bytes_accessed=bytes_accessed)

    compiler_params = pltpu.CompilerParams(
        dimension_semantics=("parallel", "parallel", "arbitrary"),
        vmem_limit_bytes=vmem_limit_bytes,
    )

    if not has_mask:
        kernel = functools.partial(_attn_kernel_nomask, scale=scale)
        grid_spec = pltpu.PrefetchScalarGridSpec(
            num_scalar_prefetch=0,
            grid=grid,
            in_specs=[
                pl.BlockSpec((1, tq, D), lambda b, qi, ki: (b, qi, 0)),
                pl.BlockSpec((1, tk, D), lambda b, qi, ki: (b, ki, 0)),
                pl.BlockSpec((1, tk, Dv_p), lambda b, qi, ki: (b, ki, 0)),
            ],
            out_specs=pl.BlockSpec((1, tq, Dv_p), lambda b, qi, ki: (b, qi, 0)),
            scratch_shapes=scratch_shapes,
        )
        out = pl.pallas_call(
            kernel,
            out_shape=jax.ShapeDtypeStruct((B, Lq, Dv_p), out_dtype),
            grid_spec=grid_spec,
            compiler_params=compiler_params,
            cost_estimate=cost,
        )(Q, K, V)
    else:
        assert mask.shape == (B, Lq, Lk)
        mask_bool = mask.astype(jnp.bool_)
        # Per-(b, qi, ki) block classification for compute skipping (prefetched into SMEM).
        blocks = mask_bool.reshape(B, nq, tq, nk, tk)
        any_m = jnp.any(blocks, axis=(2, 4))
        all_m = jnp.all(blocks, axis=(2, 4))
        binfo = jnp.where(all_m, 2, jnp.where(any_m, 1, 0)).astype(jnp.int32).reshape(-1)
        mask_i8 = mask_bool.astype(jnp.int8)  # 4x smaller than int32 in HBM/VMEM
        # TODO(synk): on v5e, bit-pack the mask (8 keys/byte) and expand in-kernel to cut
        # mask HBM traffic further when most blocks are partial.

        kernel = functools.partial(_attn_kernel_masked, scale=scale)
        grid_spec = pltpu.PrefetchScalarGridSpec(
            num_scalar_prefetch=1,
            grid=grid,
            in_specs=[
                pl.BlockSpec((1, tq, D), lambda b, qi, ki, info: (b, qi, 0)),
                pl.BlockSpec((1, tk, D), lambda b, qi, ki, info: (b, ki, 0)),
                pl.BlockSpec((1, tk, Dv_p), lambda b, qi, ki, info: (b, ki, 0)),
                pl.BlockSpec((1, tq, tk), lambda b, qi, ki, info: (b, qi, ki)),
            ],
            out_specs=pl.BlockSpec((1, tq, Dv_p), lambda b, qi, ki, info: (b, qi, 0)),
            scratch_shapes=scratch_shapes,
        )
        out = pl.pallas_call(
            kernel,
            out_shape=jax.ShapeDtypeStruct((B, Lq, Dv_p), out_dtype),
            grid_spec=grid_spec,
            compiler_params=compiler_params,
            cost_estimate=cost,
        )(binfo, Q, K, V, mask_i8)

    if Dv_p != Dv:
        out = out[..., :Dv]
    return out


if __name__ == "__main__":
    def ref_attn(Q, K, V, mask, dk):
        w = jnp.einsum("bqd,bkd->bqk", Q, K)
        if mask is not None:
            w = jnp.where(mask, -jnp.inf, w)
        w = jax.nn.softmax(w / (dk ** 0.5), axis=-1)
        return jnp.einsum("bqk,bkd->bqd", w, V)

    # --- small shapes consistent with the module (full-extent fallback + Dv padding) ---
    B, Lq, Lk, D, Dv = 2, 8, 8, 32, 32
    key = jax.random.PRNGKey(0)
    kq, kk, kv, km = jax.random.split(key, 4)
    Q = jax.random.normal(kq, (B, Lq, D), dtype=jnp.float32)
    K = jax.random.normal(kk, (B, Lk, D), dtype=jnp.float32)
    V = jax.random.normal(kv, (B, Lk, Dv), dtype=jnp.float32)
    mask = jax.random.bernoulli(km, p=0.2, shape=(B, Lq, Lk))
    mask = mask.at[:, :, 0].set(False)  # avoid fully-masked rows (NaN in torch too)

    out_nomask = attention(Q, K, V, mask=None, dk=64)
    out_masked = attention(Q, K, V, mask=mask, dk=64)
    jax.block_until_ready((out_nomask, out_masked))
    # Tolerance accounts for the approx (EUP) reciprocal in the finalize step.
    assert jnp.allclose(out_nomask, ref_attn(Q, K, V, None, 64), atol=2e-3, rtol=2e-3)
    assert jnp.allclose(out_masked, ref_attn(Q, K, V, mask, 64), atol=2e-3, rtol=2e-3)

    # --- tiled online-softmax path with block-structured mask (info = 0 / 1 / 2 blocks) ---
    B2, L2, D2, Dv2 = 2, 256, 64, 128
    kq2, kk2, kv2, km2 = jax.random.split(jax.random.PRNGKey(1), 4)
    Q2 = jax.random.normal(kq2, (B2, L2, D2), dtype=jnp.float32)
    K2 = jax.random.normal(kk2, (B2, L2, D2), dtype=jnp.float32)
    V2 = jax.random.normal(kv2, (B2, L2, Dv2), dtype=jnp.float32)
    mask2 = jnp.zeros((B2, L2, L2), dtype=bool)
    mask2 = mask2.at[:, :128, 128:].set(True)  # fully-masked 128x128 blocks (skipped)
    mask2 = mask2.at[:, 128:, 128:].set(
        jax.random.bernoulli(km2, p=0.3, shape=(B2, 128, 128)))  # partial blocks
    ref2 = ref_attn(Q2, K2, V2, mask2, 64)

    out2 = attention(Q2, K2, V2, mask=mask2, dk=64, block_q=128, block_k=128)
    jax.block_until_ready(out2)
    assert jnp.allclose(out2, ref2, atol=2e-3, rtol=2e-3)

    # Default tile selection (tq=tk=256) exercises the lane-replication tile path.
    out2b = attention(Q2, K2, V2, mask=mask2, dk=64)
    jax.block_until_ready(out2b)
    assert jnp.allclose(out2b, ref2, atol=2e-3, rtol=2e-3)

    # --- bf16 operands (halved HBM traffic, bf16 MXU path; softmax math stays f32) ---
    Qb, Kb, Vb = (x.astype(jnp.bfloat16) for x in (Q2, K2, V2))
    out_bf16 = attention(Qb, Kb, Vb, mask=mask2, dk=64)
    jax.block_until_ready(out_bf16)
    ref_bf16 = ref_attn(Qb.astype(jnp.float32), Kb.astype(jnp.float32),
                        Vb.astype(jnp.float32), mask2, 64)
    assert jnp.allclose(out_bf16.astype(jnp.float32), ref_bf16, atol=5e-2, rtol=5e-2)

    print("KERNEL_OK")
</pallas_src>

<mosaic_0001>
module attributes {stable_mosaic.version = 11 : i64} {
  func.func @_attn_kernel_nomask(%arg0: i32, %arg1: i32, %arg2: i32, %arg3: memref<1x8x32xf32, #tpu.memory_space<vmem>>, %arg4: memref<1x8x32xf32, #tpu.memory_space<vmem>>, %arg5: memref<1x8x128xf32, #tpu.memory_space<vmem>>, %arg6: memref<1x8x128xf32, #tpu.memory_space<vmem>>, %arg7: memref<8x128xf32, #tpu.memory_space<vmem>>, %arg8: memref<8x128xf32, #tpu.memory_space<vmem>>, %arg9: memref<8x128xf32, #tpu.memory_space<vmem>>, %arg10: memref<8x32xf32, #tpu.memory_space<vmem>>) attributes {dimension_semantics = [#tpu.dimension_semantics<parallel>, #tpu.dimension_semantics<parallel>, #tpu.dimension_semantics<arbitrary>], iteration_bounds = array<i64: 2, 1, 1>, scalar_prefetch = 0 : i64, scratch_operands = 4 : i64, tpu.core_type = #tpu.core_type<tc>, window_params = [{transform_indices = @transform_0, window_bounds = array<i64: 1, 8, 32>}, {transform_indices = @transform_1, window_bounds = array<i64: 1, 8, 32>}, {transform_indices = @transform_2, window_bounds = array<i64: 1, 8, 128>}, {transform_indices = @transform_3, window_bounds = array<i64: 1, 8, 128>}]} {
    %c0_i32 = arith.constant 0 : i32
    %0 = arith.cmpi eq, %arg2, %c0_i32 : i32
    %1 = arith.extui %0 : i1 to i32
    %c0_i32_0 = arith.constant 0 : i32
    %2 = arith.cmpi ne, %1, %c0_i32_0 : i32
    scf.if %2 {
      %cst_25 = arith.constant 0xFF800000 : f32
      %36 = vector.broadcast %cst_25 : f32 to vector<8x128xf32>
      %c0_26 = arith.constant 0 : index
      %c0_27 = arith.constant 0 : index
      %37 = vector.load %arg7[%c0_26, %c0_27] : memref<8x128xf32, #tpu.memory_space<vmem>>, vector<8x128xf32>
      tpu.vector_store %arg7[%c0_26, %c0_27], %36 {strides = array<i32>} : memref<8x128xf32, #tpu.memory_space<vmem>>, vector<8x128xf32>,
      %cst_28 = arith.constant 0.000000e+00 : f32
      %38 = vector.broadcast %cst_28 : f32 to vector<8x128xf32>
      %c0_29 = arith.constant 0 : index
      %c0_30 = arith.constant 0 : index
      %39 = vector.load %arg8[%c0_29, %c0_30] : memref<8x128xf32, #tpu.memory_space<vmem>>, vector<8x128xf32>
      tpu.vector_store %arg8[%c0_29, %c0_30], %38 {strides = array<i32>} : memref<8x128xf32, #tpu.memory_space<vmem>>, vector<8x128xf32>,
      %cst_31 = arith.constant 0.000000e+00 : f32
      %40 = vector.broadcast %cst_31 : f32 to vector<8x128xf32>
      %c0_32 = arith.constant 0 : index
      %c0_33 = arith.constant 0 : index
      %41 = vector.load %arg9[%c0_32, %c0_33] : memref<8x128xf32, #tpu.memory_space<vmem>>, vector<8x128xf32>
      tpu.vector_store %arg9[%c0_32, %c0_33], %40 {strides = array<i32>} : memref<8x128xf32, #tpu.memory_space<vmem>>, vector<8x128xf32>,
      %c0_34 = arith.constant 0 : index
      %c0_35 = arith.constant 0 : index
      %c0_36 = arith.constant 0 : index
      %42 = vector.load %arg3[%c0_34, %c0_35, %c0_36] : memref<1x8x32xf32, #tpu.memory_space<vmem>>, vector<1x8x32xf32>
      %43 = vector.shape_cast %42 : vector<1x8x32xf32> to vector<8x32xf32>
      %cst_37 = arith.constant 1.250000e-01 : f32
      %44 = vector.broadcast %cst_37 : f32 to vector<8x32xf32>
      %45 = arith.mulf %43, %44 : vector<8x32xf32>
      %c0_38 = arith.constant 0 : index
      %c0_39 = arith.constant 0 : index
      %46 = vector.load %arg10[%c0_38, %c0_39] : memref<8x32xf32, #tpu.memory_space<vmem>>, vector<8x32xf32>
      tpu.vector_store %arg10[%c0_38, %c0_39], %45 {strides = array<i32>} : memref<8x32xf32, #tpu.memory_space<vmem>>, vector<8x32xf32>,
    } else {
    }
    %c0 = arith.constant 0 : index
    %c0_1 = arith.constant 0 : index
    %3 = vector.load %arg10[%c0, %c0_1] : memref<8x32xf32, #tpu.memory_space<vmem>>, vector<8x32xf32>
    %c0_2 = arith.constant 0 : index
    %c0_3 = arith.constant 0 : index
    %c0_4 = arith.constant 0 : index
    %4 = vector.load %arg4[%c0_2, %c0_3, %c0_4] : memref<1x8x32xf32, #tpu.memory_space<vmem>>, vector<1x8x32xf32>
    %5 = vector.shape_cast %4 : vector<1x8x32xf32> to vector<8x32xf32>
    %c0_5 = arith.constant 0 : index
    %c0_6 = arith.constant 0 : index
    %c0_7 = arith.constant 0 : index
    %6 = vector.load %arg5[%c0_5, %c0_6, %c0_7] : memref<1x8x128xf32, #tpu.memory_space<vmem>>, vector<1x8x128xf32>
    %7 = vector.shape_cast %6 : vector<1x8x128xf32> to vector<8x128xf32>
    %cst = arith.constant dense<0.000000e+00> : vector<8x8xf32>
    %8 = tpu.matmul %3, %5, %cst {dimension_numbers = #tpu.dot_dimension_numbers<[1], [1], [0], [0], [0, 0, 1, 0], [], []>} : vector<8x32xf32>, vector<8x32xf32>, vector<8x8xf32> -> vector<8x8xf32>
    %c0_8 = arith.constant 0 : index
    %c0_9 = arith.constant 0 : index
    %9 = vector.load %arg7[%c0_8, %c0_9] : memref<8x128xf32, #tpu.memory_space<vmem>>, vector<8x128xf32>
    %cst_10 = arith.constant dense<0xFF800000> : vector<8xf32>
    %10 = vector.multi_reduction <maximumf>, %8, %cst_10 [1] : vector<8x8xf32> to vector<8xf32>
    %11 = vector.shape_cast %10 : vector<8xf32> to vector<8x1xf32>
    %12 = vector.broadcast %11 : vector<8x1xf32> to vector<8x128xf32>
    %13 = arith.maximumf %9, %12 : vector<8x128xf32>
    %14 = arith.subf %9, %13 : vector<8x128xf32>
    %15 = math.exp %14 : vector<8x128xf32>
    %16 = vector.extract_strided_slice %13 {offsets = [0, 0], sizes = [8, 1], strides = [1, 1]} : vector<8x128xf32> to vector<8x1xf32>
    %17 = vector.broadcast %16 : vector<8x1xf32> to vector<8x8xf32>
    %18 = arith.subf %8, %17 : vector<8x8xf32>
    %19 = math.exp %18 : vector<8x8xf32>
    %c0_11 = arith.constant 0 : index
    %c0_12 = arith.constant 0 : index
    %20 = vector.load %arg8[%c0_11, %c0_12] : memref<8x128xf32, #tpu.memory_space<vmem>>, vector<8x128xf32>
    %21 = arith.mulf %15, %20 : vector<8x128xf32>
    %cst_13 = arith.constant dense<0.000000e+00> : vector<8xf32>
    %22 = vector.multi_reduction <add>, %19, %cst_13 [1] : vector<8x8xf32> to vector<8xf32>
    %23 = vector.shape_cast %22 : vector<8xf32> to vector<8x1xf32>
    %24 = vector.broadcast %23 : vector<8x1xf32> to vector<8x128xf32>
    %25 = arith.addf %21, %24 : vector<8x128xf32>
    %c0_14 = arith.constant 0 : index
    %c0_15 = arith.constant 0 : index
    %26 = vector.load %arg8[%c0_14, %c0_15] : memref<8x128xf32, #tpu.memory_space<vmem>>, vector<8x128xf32>
    tpu.vector_store %arg8[%c0_14, %c0_15], %25 {strides = array<i32>} : memref<8x128xf32, #tpu.memory_space<vmem>>, vector<8x128xf32>,
    %c0_16 = arith.constant 0 : index
    %c0_17 = arith.constant 0 : index
    %27 = vector.load %arg9[%c0_16, %c0_17] : memref<8x128xf32, #tpu.memory_space<vmem>>, vector<8x128xf32>
    %28 = arith.mulf %15, %27 : vector<8x128xf32>
    %cst_18 = arith.constant dense<0.000000e+00> : vector<8x128xf32>
    %29 = tpu.matmul %19, %7, %cst_18 {dimension_numbers = #tpu.dot_dimension_numbers<[1], [0], [0], [1], [0, 0, 1, 1], [], []>} : vector<8x8xf32>, vector<8x128xf32>, vector<8x128xf32> -> vector<8x128xf32>
    %30 = arith.addf %28, %29 : vector<8x128xf32>
    %c0_19 = arith.constant 0 : index
    %c0_20 = arith.constant 0 : index
    %31 = vector.load %arg9[%c0_19, %c0_20] : memref<8x128xf32, #tpu.memory_space<vmem>>, vector<8x128xf32>
    tpu.vector_store %arg9[%c0_19, %c0_20], %30 {strides = array<i32>} : memref<8x128xf32, #tpu.memory_space<vmem>>, vector<8x128xf32>,
    %c0_21 = arith.constant 0 : index
    %c0_22 = arith.constant 0 : index
    %32 = vector.load %arg7[%c0_21, %c0_22] : memref<8x128xf32, #tpu.memory_space<vmem>>, vector<8x128xf32>
    tpu.vector_store %arg7[%c0_21, %c0_22], %13 {strides = array<i32>} : memref<8x128xf32, #tpu.memory_space<vmem>>, vector<8x128xf32>,
    %c0_i32_23 = arith.constant 0 : i32
    %33 = arith.cmpi eq, %arg2, %c0_i32_23 : i32
    %34 = arith.extui %33 : i1 to i32
    %c0_i32_24 = arith.constant 0 : i32
    %35 = arith.cmpi ne, %34, %c0_i32_24 : i32
    scf.if %35 {
      %c0_25 = arith.constant 0 : index
      %c0_26 = arith.constant 0 : index
      %36 = vector.load %arg8[%c0_25, %c0_26] : memref<8x128xf32, #tpu.memory_space<vmem>>, vector<8x128xf32>
      %37 = tpu.reciprocal %36 {approx = true} : vector<8x128xf32> -> vector<8x128xf32>
      %c0_27 = arith.constant 0 : index
      %c0_28 = arith.constant 0 : index
      %38 = vector.load %arg9[%c0_27, %c0_28] : memref<8x128xf32, #tpu.memory_space<vmem>>, vector<8x128xf32>
      %39 = arith.mulf %38, %37 : vector<8x128xf32>
      %c0_29 = arith.constant 0 : index
      %c0_30 = arith.constant 0 : index
      %c0_31 = arith.constant 0 : index
      %40 = vector.load %arg6[%c0_29, %c0_30, %c0_31] : memref<1x8x128xf32, #tpu.memory_space<vmem>>, vector<1x8x128xf32>
      %41 = vector.shape_cast %40 : vector<1x8x128xf32> to vector<8x128xf32>
      %42 = vector.shape_cast %39 : vector<8x128xf32> to vector<1x8x128xf32>
      tpu.vector_store %arg6[%c0_29, %c0_30, %c0_31], %42 {strides = array<i32>} : memref<1x8x128xf32, #tpu.memory_space<vmem>>, vector<1x8x128xf32>,
    } else {
    }
    return
  }
  func.func @transform_0(%arg0: i32, %arg1: i32, %arg2: i32) -> (i32, i32, i32) {
    %c0_i32 = arith.constant 0 : i32
    %c0_i32_0 = arith.constant 0 : i32
    return %arg0, %arg1, %c0_i32 : i32, i32, i32
  }
  func.func @transform_1(%arg0: i32, %arg1: i32, %arg2: i32) -> (i32, i32, i32) {
    %c0_i32 = arith.constant 0 : i32
    %c0_i32_0 = arith.constant 0 : i32
    return %arg0, %arg2, %c0_i32 : i32, i32, i32
  }
  func.func @transform_2(%arg0: i32, %arg1: i32, %arg2: i32) -> (i32, i32, i32) {
    %c0_i32 = arith.constant 0 : i32
    %c0_i32_0 = arith.constant 0 : i32
    return %arg0, %arg2, %c0_i32 : i32, i32, i32
  }
  func.func @transform_3(%arg0: i32, %arg1: i32, %arg2: i32) -> (i32, i32, i32) {
    %c0_i32 = arith.constant 0 : i32
    %c0_i32_0 = arith.constant 0 : i32
    return %arg0, %arg1, %c0_i32 : i32, i32, i32
  }
}

</mosaic_0001>

<llo_original>
// kernel: tpu_custom_call.1
$region0: #{tpu_custom_call.1}
  #allocation0 [shape = 'u32[]', space=smem, size = 0x4, offset = 0x4, fixed_abs, tag = 'smem constant byte address 0x4 - core index']
  #allocation1 [shape = 'u32[72,128]{1,0:T(1,128)}', space=vmem, size = 0x9000, scoped, tag = 'internal scratch']
  #allocation2 [shape = 'f32[8,128]{1,0:T(8,128)}', space=vmem, size = 0x1000, scoped, tag = 'scratch operand']
  #allocation3 [shape = 'f32[8,128]{1,0:T(8,128)}', space=vmem, size = 0x1000, scoped, tag = 'scratch operand']
  #allocation4 [shape = 'f32[8,128]{1,0:T(8,128)}', space=vmem, size = 0x1000, scoped, tag = 'scratch operand']
  #allocation5 [shape = 'f32[8,32]{1,0:T(8,128)}', space=vmem, size = 0x1000, scoped, tag = 'scratch operand']
  %s0 = inlined_call_operand.hbm [shape: f32[2,8,32], index: 0, kind: input, shape index: {}]
  %s1 = inlined_call_operand.hbm [shape: f32[2,8,32], index: 1, kind: input, shape index: {}]
  %s2 = inlined_call_operand.hbm [shape: f32[2,8,128], index: 2, kind: input, shape index: {}]
  %s3 = inlined_call_operand.hbm [shape: f32[2,8,128], index: 3, kind: output, shape index: {}]
  %s4 = sld [smem:[#allocation0]]
  $region65: #{tpu_custom_call.1} parent=0
    _
  %s6 = ssub.s32 1, %s4
  %s7 = scalar_select 0, %s6, %s4
  $region1: #{tpu_custom_call.1} parent=0
    #allocation6 [shape = 'u8[8192]{0}', space=vmem, size = 0x2000, scoped, tag = 'input window, operand 0']
    #allocation7 [shape = 's32[2]{0}', space=sflag, size = 0x8, scoped, tag = 'scoped memory for tpu_custom_call.1']
    #allocation8 [shape = 's32[2]{0}', space=sflag, size = 0x8, scoped, tag = 'scoped memory for tpu_custom_call.1']
    #allocation9 [shape = 'u8[8192]{0}', space=vmem, size = 0x2000, scoped, tag = 'input window, operand 1']
    #allocation10 [shape = 's32[2]{0}', space=sflag, size = 0x8, scoped, tag = 'scoped memory for tpu_custom_call.1']
    #allocation11 [shape = 'u8[8192]{0}', space=vmem, size = 0x2000, scoped, tag = 'input window, operand 2']
    #allocation12 [shape = 'u8[8192]{0}', space=vmem, size = 0x2000, scoped, tag = 'output window, operand 0']
    %8 = vsyncpa [#allocation7], 0
    %s9 = scalar_lea.sflag [#allocation7], 1
    %10 = vsyncpa %s9, 0
    %11 = vsyncpa [#allocation10], 0
    %s12 = scalar_lea.sflag [#allocation10], 1
    %13 = vsyncpa %s12, 0
    %14 = vsyncpa [#allocation8], 0
    %s15 = scalar_lea.sflag [#allocation8], 1
    %16 = vsyncpa %s15, 0
    loop: start=0, step=1, limit=4
    $region2: #{tpu_custom_call.1} parent=1 // loop_pre_header
      _
    $region3: #{tpu_custom_call.1} parent=1 // loop_header
      %s18 = sphi 0, %s22
      %p19 = scmp.ge.s32.totalorder %s18, 4
      %s25 = sphi 0, %s44
      %s26 = sphi 0, %s40
      %s27 = sphi 0, %s36
      %s28 = sphi 0, %s25
      %s29 = sphi 0, %s26
      %s30 = sphi 0, %s27
      %s31 = sphi 0, %s28
      %s32 = sphi 0, %s29
      %s33 = sphi 0, %s30
      %s49 = sphi 0, %s51
      %s52 = sphi 0, %s49
      %s53 = sphi 0, %s52
      %s69 = sphi 0, %s53
      %s77 = sphi 0, %s79
      %s80 = sphi 0, %s77
      %s81 = sphi 0, %s80
      %s97 = sphi 0, %s81
      %s105 = sphi 0, %s107
      %s108 = sphi 0, %s105
      %s109 = sphi 0, %s108
      %s125 = sphi 0, %s109
      %s133 = sphi 0, %s135
      %s136 = sphi 0, %s133
      %s137 = sphi 0, %s136
      %s153 = sphi 0, %s137
    $region4: #{tpu_custom_call.1} parent=1 // loop_header_branch
      %21 = sbr.rel (%p19) target = $region8
    $region5: #{tpu_custom_call.1} parent=1 // loop_body
      %s23 = ssub.s32 %s18, 1
      %s24 = ssub.s32 %s18, 2
      %s34 = sadd.s32 1, %s27
      %p35 = scmp.ge.s32.totalorder %s34, 1
      %s36 = scalar_select %p35, 0, %s34
      %s37 = sadd.s32 1, %s26
      %s38 = scalar_select %p35, %s37, %s26
      %p39 = scmp.ge.s32.totalorder %s38, 1
      %s40 = scalar_select %p39, 0, %s38
      %s41 = sadd.s32 1, %s25
      %s42 = scalar_select %p39, %s41, %s25
      %p43 = scmp.ge.s32.totalorder %s42, 2
      %s44 = scalar_select %p43, 0, %s42
      %s45 = ssub.s32 %s25, %s44
      %s46 = ssub.s32 %s26, %s40
      %s47 = sor.u32 %s45, %s46
      %p48 = scmp.eq.s32.totalorder %s47, 0
      %s50 = sadd.s32 %s49, 1
      %s51 = scalar_select %p48, %s49, %s50
      %p54 = pneg %p48
      %p55 = scmp.eq.s32.totalorder %s18, 1
      %p56 = por %p54, %p55
      %p57 = scmp.ne.s32.totalorder %s49, %s52
      %p58 = scmp.eq.s32.totalorder %s18, 0
      %p59 = por %p57, %p58
      %p60 = scmp.ne.s32.totalorder %s49, %s52
      %p61 = scmp.eq.s32.totalorder %s23, 1
      %p62 = por %p60, %p61
      %p63 = scmp.ne.s32.totalorder %s52, %s53
      %p64 = scmp.eq.s32.totalorder %s23, 0
      %p65 = por %p63, %p64
      %p66 = scmp.ne.s32.totalorder %s52, %s53
      %p67 = scmp.eq.s32.totalorder %s24, 1
      %p68 = por %p66, %p67
      %p70 = scmp.ne.s32.totalorder %s53, %s69
      %p71 = scmp.eq.s32.totalorder %s24, 0
      %p72 = por %p70, %p71
      %s73 = ssub.s32 %s25, %s44
      %s74 = ssub.s32 %s27, %s36
      %s75 = sor.u32 %s73, %s74
      %p76 = scmp.eq.s32.totalorder %s75, 0
      %s78 = sadd.s32 %s77, 1
      %s79 = scalar_select %p76, %s77, %s78
      %p82 = pneg %p76
      %p83 = scmp.eq.s32.totalorder %s18, 1
      %p84 = por %p82, %p83
      %p85 = scmp.ne.s32.totalorder %s77, %s80
      %p86 = scmp.eq.s32.totalorder %s18, 0
      %p87 = por %p85, %p86
      %p88 = scmp.ne.s32.totalorder %s77, %s80
      %p89 = scmp.eq.s32.totalorder %s23, 1
      %p90 = por %p88, %p89
      %p91 = scmp.ne.s32.totalorder %s80, %s81
      %p92 = scmp.eq.s32.totalorder %s23, 0
      %p93 = por %p91, %p92
      %p94 = scmp.ne.s32.totalorder %s80, %s81
      %p95 = scmp.eq.s32.totalorder %s24, 1
      %p96 = por %p94, %p95
      %p98 = scmp.ne.s32.totalorder %s81, %s97
      %p99 = scmp.eq.s32.totalorder %s24, 0
      %p100 = por %p98, %p99
      %s101 = ssub.s32 %s25, %s44
      %s102 = ssub.s32 %s27, %s36
      %s103 = sor.u32 %s101, %s102
      %p104 = scmp.eq.s32.totalorder %s103, 0
      %s106 = sadd.s32 %s105, 1
      %s107 = scalar_select %p104, %s105, %s106
      %p110 = pneg %p104
      %p111 = scmp.eq.s32.totalorder %s18, 1
      %p112 = por %p110, %p111
      %p113 = scmp.ne.s32.totalorder %s105, %s108
      %p114 = scmp.eq.s32.totalorder %s18, 0
      %p115 = por %p113, %p114
      %p116 = scmp.ne.s32.totalorder %s105, %s108
      %p117 = scmp.eq.s32.totalorder %s23, 1
      %p118 = por %p116, %p117
      %p119 = scmp.ne.s32.totalorder %s108, %s109
      %p120 = scmp.eq.s32.totalorder %s23, 0
      %p121 = por %p119, %p120
      %p122 = scmp.ne.s32.totalorder %s108, %s109
      %p123 = scmp.eq.s32.totalorder %s24, 1
      %p124 = por %p122, %p123
      %p126 = scmp.ne.s32.totalorder %s109, %s125
      %p127 = scmp.eq.s32.totalorder %s24, 0
      %p128 = por %p126, %p127
      %s129 = ssub.s32 %s25, %s44
      %s130 = ssub.s32 %s26, %s40
      %s131 = sor.u32 %s129, %s130
      %p132 = scmp.eq.s32.totalorder %s131, 0
      %s134 = sadd.s32 %s133, 1
      %s135 = scalar_select %p132, %s133, %s134
      %p138 = pneg %p132
      %p139 = scmp.eq.s32.totalorder %s18, 1
      %p140 = por %p138, %p139
      %p141 = scmp.ne.s32.totalorder %s133, %s136
      %p142 = scmp.eq.s32.totalorder %s18, 0
      %p143 = por %p141, %p142
      %p144 = scmp.ne.s32.totalorder %s133, %s136
      %p145 = scmp.eq.s32.totalorder %s23, 1
      %p146 = por %p144, %p145
      %p147 = scmp.ne.s32.totalorder %s136, %s137
      %p148 = scmp.eq.s32.totalorder %s23, 0
      %p149 = por %p147, %p148
      %p150 = scmp.ne.s32.totalorder %s136, %s137
      %p151 = scmp.eq.s32.totalorder %s24, 1
      %p152 = por %p150, %p151
      %p154 = scmp.ne.s32.totalorder %s137, %s153
      %p155 = scmp.eq.s32.totalorder %s24, 0
      %p156 = por %p154, %p155
      %p157 = scmp.le.s32.totalorder 1, %s18
      %p158 = scmp.lt.s32.totalorder %s18, 3
      %p159 = pnand %p157, %p158
      %p160 = pneg %p159
      // Predicated region
      $region9: #{tpu_custom_call.1} parent=5 // pred_check
        _
      $region10: #{tpu_custom_call.1} parent=5 // pred_check_branch
        %162 = sbr.rel (%p159) target = $region12
      $region11: #{tpu_custom_call.1} parent=5 // pred_region
        %s163 = ssub.s32 %s18, 1
      $region12: #{tpu_custom_call.1} parent=5 // pred_fallthru
        _
      %p164 = scmp.lt.s32.totalorder %s18, 2
      // Predicated region
      $region13: #{tpu_custom_call.1} parent=5 // pred_check
        %p165 = pneg %p164
      $region14: #{tpu_custom_call.1} parent=5 // pred_check_branch
        %167 = sbr.rel (%p165) target = $region16
      $region15: #{tpu_custom_call.1} parent=5 // pred_region
        // Predicated region
        $region17: #{tpu_custom_call.1} parent=15 // pred_check
          %p168 = pneg %p59
        $region18: #{tpu_custom_call.1} parent=15 // pred_check_branch
          %170 = sbr.rel (%p168) target = $region20
        $region19: #{tpu_custom_call.1} parent=15 // pred_region
          %s171 = sand.u32 %s49, 1
          %s172 = scalar_lea.sflag [#allocation7], %s171
          %s173 = sand.u32 %s49, 1
          %s174 = smul.addr %s173, 8
          %s175 = scalar_lea.vmem [#allocation6], %s174
          %177 = vsyncadd %s172, 0
          %s178 = sadd.s32 %s26, %s25
          %s179 = smul.addr %s178, 8
          %s180 = scalar_lea.hbm %s0, %s179
          %s182 = sshll.u32 %s180, 4
          %s183 = int_to_ptr.hbm [resolvable:$true] %s182
          %s184 = sshll.u32 %s175, 4
          %s185 = int_to_ptr.vmem [resolvable:$true] %s184
          %187 = dma.hbm_to_vmem [thread:$0]  %s183, 128, %s185, %s172
        $region20: #{tpu_custom_call.1} parent=15 // pred_fallthru
          _
        // Predicated region
        $region21: #{tpu_custom_call.1} parent=15 // pred_check
          %p188 = pneg %p87
        $region22: #{tpu_custom_call.1} parent=15 // pred_check_branch
          %190 = sbr.rel (%p188) target = $region24
        $region23: #{tpu_custom_call.1} parent=15 // pred_region
          %s191 = sand.u32 %s18, 1
          %s192 = scalar_lea.sflag [#allocation10], %s191
          %s193 = sand.u32 %s77, 1
          %s194 = smul.addr %s193, 8
          %s195 = scalar_lea.vmem [#allocation9], %s194
          %197 = vsyncadd %s192, 0
          %s198 = sadd.s32 %s27, %s25
          %s199 = smul.addr %s198, 8
          %s200 = scalar_lea.hbm %s1, %s199
          %s202 = sshll.u32 %s200, 4
          %s203 = int_to_ptr.hbm [resolvable:$true] %s202
          %s204 = sshll.u32 %s195, 4
          %s205 = int_to_ptr.vmem [resolvable:$true] %s204
          %207 = dma.hbm_to_vmem [thread:$0]  %s203, 128, %s205, %s192
        $region24: #{tpu_custom_call.1} parent=15 // pred_fallthru
          _
        // Predicated region
        $region25: #{tpu_custom_call.1} parent=15 // pred_check
          %p208 = pneg %p115
        $region26: #{tpu_custom_call.1} parent=15 // pred_check_branch
          %210 = sbr.rel (%p208) target = $region28
        $region27: #{tpu_custom_call.1} parent=15 // pred_region
          %s211 = sand.u32 %s18, 1
          %s212 = scalar_lea.sflag [#allocation10], %s211
          %s213 = sand.u32 %s105, 1
          %s214 = smul.addr %s213, 8
          %s215 = scalar_lea.vmem [#allocation11], %s214
          %217 = vsyncadd %s212, 0
          %s218 = sadd.s32 %s27, %s25
          %s219 = smul.addr %s218, 8
          %s220 = scalar_lea.hbm %s2, %s219
          %s222 = sshll.u32 %s220, 4
          %s223 = int_to_ptr.hbm [resolvable:$true] %s222
          %s224 = sshll.u32 %s215, 4
          %s225 = int_to_ptr.vmem [resolvable:$true] %s224
          %227 = dma.hbm_to_vmem [thread:$0]  %s223, 128, %s225, %s212
        $region28: #{tpu_custom_call.1} parent=15 // pred_fallthru
          _
      $region16: #{tpu_custom_call.1} parent=5 // pred_fallthru
        _
      %p228 = scmp.le.s32.totalorder 1, %s18
      %p229 = scmp.lt.s32.totalorder %s18, 3
      %p230 = pnand %p228, %p229
      %p231 = pneg %p230
      // Predicated region
      $region29: #{tpu_custom_call.1} parent=5 // pred_check
        _
      $region30: #{tpu_custom_call.1} parent=5 // pred_check_branch
        %233 = sbr.rel (%p230) target = $region32
      $region31: #{tpu_custom_call.1} parent=5 // pred_region
        %s234 = ssub.s32 %s18, 1
        %s235 = sand.u32 %s52, 1
        %s236 = scalar_lea.sflag [#allocation7], %s235
        %s237 = sand.u32 %s52, 1
        %s238 = smul.addr %s237, 8
        %s239 = scalar_lea.vmem [#allocation6], %s238
        // Predicated region
        $region33: #{tpu_custom_call.1} parent=31 // pred_check
          %p240 = pneg %p65
        $region34: #{tpu_custom_call.1} parent=31 // pred_check_branch
          %242 = sbr.rel (%p240) target = $region36
        $region35: #{tpu_custom_call.1} parent=31 // pred_region
          %244 = dma.done %s236, 128
        $region36: #{tpu_custom_call.1} parent=31 // pred_fallthru
          _
        %s245 = sand.u32 %s23, 1
        %s246 = scalar_lea.sflag [#allocation10], %s245
        %s247 = sand.u32 %s80, 1
        %s248 = smul.addr %s247, 8
        %s249 = scalar_lea.vmem [#allocation9], %s248
        // Predicated region
        $region37: #{tpu_custom_call.1} parent=31 // pred_check
          %p250 = pneg %p93
        $region38: #{tpu_custom_call.1} parent=31 // pred_check_branch
          %252 = sbr.rel (%p250) target = $region40
        $region39: #{tpu_custom_call.1} parent=31 // pred_region
          %254 = dma.done %s246, 128
        $region40: #{tpu_custom_call.1} parent=31 // pred_fallthru
          _
        %s255 = sand.u32 %s23, 1
        %s256 = scalar_lea.sflag [#allocation10], %s255
        %s257 = sand.u32 %s108, 1
        %s258 = smul.addr %s257, 8
        %s259 = scalar_lea.vmem [#allocation11], %s258
        // Predicated region
        $region41: #{tpu_custom_call.1} parent=31 // pred_check
          %p260 = pneg %p121
        $region42: #{tpu_custom_call.1} parent=31 // pred_check_branch
          %262 = sbr.rel (%p260) target = $region44
        $region43: #{tpu_custom_call.1} parent=31 // pred_region
          %264 = dma.done %s256, 128
        $region44: #{tpu_custom_call.1} parent=31 // pred_fallthru
          _
        %s265 = sand.u32 %s52, 1
        %s266 = scalar_lea.sflag [#allocation7], %s265
        %s267 = sand.u32 %s52, 1
        %s268 = smul.addr %s267, 8
        %s269 = scalar_lea.vmem [#allocation6], %s268
        %p270 = pneg %p65
        %p271 = pneg %p62
        %s272 = sand.u32 %s23, 1
        %s273 = scalar_lea.sflag [#allocation10], %s272
        %s274 = sand.u32 %s80, 1
        %s275 = smul.addr %s274, 8
        %s276 = scalar_lea.vmem [#allocation9], %s275
        %p277 = pneg %p93
        %p278 = pneg %p90
        %s279 = sand.u32 %s23, 1
        %s280 = scalar_lea.sflag [#allocation10], %s279
        %s281 = sand.u32 %s108, 1
        %s282 = smul.addr %s281, 8
        %s283 = scalar_lea.vmem [#allocation11], %s282
        %p284 = pneg %p121
        %p285 = pneg %p118
        %p286 = pneg %p149
        %p287 = pneg %p146
        %s288 = sand.u32 %s136, 1
        %s289 = scalar_lea.sflag [#allocation8], %s288
        %s290 = sand.u32 %s136, 1
        %s291 = smul.addr %s290, 8
        %s292 = scalar_lea.vmem [#allocation12], %s291
        %p293 = scmp.eq.s32.totalorder %s30, 0
        // Predicated region
        $region45: #{tpu_custom_call.1} parent=31 // pred_check
          %p294 = pneg %p293
        $region46: #{tpu_custom_call.1} parent=31 // pred_check_branch
          %296 = sbr.rel (%p294) target = $region48
        $region47: #{tpu_custom_call.1} parent=31 // pred_region
          %297 = vst [vmem:[#allocation2] sm:$0xff] -inf
          %298 = vst [vmem:[#allocation3] sm:$0xff] 0.0
          %299 = vst [vmem:[#allocation4] sm:$0xff] 0.0
          %v300 = vld [vmem:[%s239] sm:$0xff]
          %v301 = vmul.f32 %v300, 0.125
          %vm302 = vcmask 261120
          %303 = vst.msk [vmem:[#allocation5] sm:$0xff] %vm302, %v301
        $region48: #{tpu_custom_call.1} parent=31 // pred_fallthru
          _
        %v304 = vld [vmem:[#allocation5] sm:$0xff]
        %v305 = vld [vmem:[%s249] sm:$0xff]
        %v306 = vld [vmem:[%s259] sm:$0xff]
        %vm307 = vcmask 261120
        %v309 = vsel %vm307, %v304, 0
        %v312 = vsel %vm307, %v305, 0
        %314 = vmatpush.xpose.msra.mxu0 0.0
        %315 = vmatpush.xpose.msra.mxu0 0.0
        %316 = vmatpush.xpose.msra.mxu0 0.0
        %317 = vmatpush.xpose.msra.mxu0 0.0
        %318 = vmatpush.xpose.msra.mxu0 0.0
        %319 = vmatpush.xpose.msra.mxu0 0.0
        %320 = vmatpush.xpose.msra.mxu0 0.0
        %321 = vmatpush.xpose.msra.mxu0 0.0
        %322 = vmatpush.xpose.msra.mxu0 0.0
        %323 = vmatpush.xpose.msra.mxu0 0.0
        %324 = vmatpush.xpose.msra.mxu0 0.0
        %325 = vmatpush.xpose.msra.mxu0 0.0
        %326 = vmatpush.xpose.msra.mxu0 0.0
        %327 = vmatpush.xpose.msra.mxu0 0.0
        %328 = vmatpush.xpose.msra.mxu0 0.0
        %329 = vmatpush.xpose.msra.mxu0 %v312
        %330 = vmatmul.f32.gmra.mxu0 %v309
        %v331 = vpop.f32.mrf.mxu0
        %v332 = vadd.f32 0.0, %v331
        %333 = vdwg.mxu0
        %v334 = vld [vmem:[#allocation2] sm:$0xff]
        %vm335 = vcmask 64512
        %v336 = vsel %vm335, %v332, -inf
        %337 = vmax.xlane.f32.xlu0 %v336
        %v338 = vpop.xlane.xlu0 %337
        %v339 = vmax.f32 %v334, %v338
        %v340 = vsub.f32 %v334, %v339
        %v341 = vmul.f32 %v340, 1.442695
        %v342 = vpow.pop %v341
        %344 = vset.pattern.permute.xlu0 0
        %345 = vperm.xlu0 %344, %v339
        %v346 = vpop.permute.xlu0 %345
        %v348 = vsub.f32 %v332, %v346
        %v349 = vmul.f32 %v348, 1.442695
        %v350 = vpow.pop %v349
        %v351 = vld [vmem:[#allocation3] sm:$0xff]
        %v352 = vmul.f32 %v342, %v351
        %v353 = vsel %vm335, %v350, 0.0
        %354 = vadd.xlane.f32.xlu0 %v353
        %v355 = vpop.xlane.xlu0 %354
        %v356 = vadd.f32 %v352, %v355
        %357 = vst [vmem:[#allocation3] sm:$0xff] %v356
        %v358 = vld [vmem:[#allocation4] sm:$0xff]
        %v359 = vmul.f32 %v342, %v358
        %v361 = vsel %vm335, %v350, 0
        %363 = vmatpush.msra.mxu0 0.0
        %364 = vmatpush.msra.mxu0 0.0
        %365 = vmatpush.msra.mxu0 0.0
        %366 = vmatpush.msra.mxu0 0.0
        %367 = vmatpush.msra.mxu0 0.0
        %368 = vmatpush.msra.mxu0 0.0
        %369 = vmatpush.msra.mxu0 0.0
        %370 = vmatpush.msra.mxu0 0.0
        %371 = vmatpush.msra.mxu0 0.0
        %372 = vmatpush.msra.mxu0 0.0
        %373 = vmatpush.msra.mxu0 0.0
        %374 = vmatpush.msra.mxu0 0.0
        %375 = vmatpush.msra.mxu0 0.0
        %376 = vmatpush.msra.mxu0 0.0
        %377 = vmatpush.msra.mxu0 0.0
        %378 = vmatpush.msra.mxu0 %v306
        %379 = vmatmul.f32.gmra.mxu0 %v361
        %v380 = vpop.f32.mrf.mxu0
        %v381 = vadd.f32 0.0, %v380
        %382 = vdwg.mxu0
        %v383 = vadd.f32 %v359, %v381
        %384 = vst [vmem:[#allocation4] sm:$0xff] %v383
        %385 = vst [vmem:[#allocation2] sm:$0xff] %v339
        // Predicated region
        $region49: #{tpu_custom_call.1} parent=31 // pred_check
          %p386 = pneg %p293
        $region50: #{tpu_custom_call.1} parent=31 // pred_check_branch
          %388 = sbr.rel (%p386) target = $region52
        $region51: #{tpu_custom_call.1} parent=31 // pred_region
          %v389 = vld [vmem:[#allocation3] sm:$0xff]
          %v390 = vrcp.pop %v389
          %v391 = vld [vmem:[#allocation4] sm:$0xff]
          %v392 = vmul.f32 %v391, %v390
          %393 = vst [vmem:[%s292] sm:$0xff] %v392
        $region52: #{tpu_custom_call.1} parent=31 // pred_fallthru
          _
        %s394 = sand.u32 %s136, 1
        %s395 = scalar_lea.sflag [#allocation8], %s394
        %s396 = sand.u32 %s136, 1
        %s397 = smul.addr %s396, 8
        %s398 = scalar_lea.vmem [#allocation12], %s397
        // Predicated region
        $region53: #{tpu_custom_call.1} parent=31 // pred_check
          %p399 = pneg %p146
        $region54: #{tpu_custom_call.1} parent=31 // pred_check_branch
          %401 = sbr.rel (%p399) target = $region56
        $region55: #{tpu_custom_call.1} parent=31 // pred_region
          %403 = vsyncadd %s395, 0
          %s404 = sadd.s32 %s29, %s28
          %s405 = smul.addr %s404, 8
          %s406 = scalar_lea.hbm %s3, %s405
          %s408 = sshll.u32 %s398, 4
          %s409 = int_to_ptr.vmem [resolvable:$true] %s408
          %s410 = sshll.u32 %s406, 4
          %s411 = int_to_ptr.hbm [resolvable:$true] %s410
          %413 = dma.vmem_to_hbm [thread:$0]  %s409, 128, %s411, %s395
        $region56: #{tpu_custom_call.1} parent=31 // pred_fallthru
          _
      $region32: #{tpu_custom_call.1} parent=5 // pred_fallthru
        _
      %p414 = scmp.le.s32.totalorder 2, %s18
      // Predicated region
      $region57: #{tpu_custom_call.1} parent=5 // pred_check
        %p415 = pneg %p414
      $region58: #{tpu_custom_call.1} parent=5 // pred_check_branch
        %417 = sbr.rel (%p415) target = $region60
      $region59: #{tpu_custom_call.1} parent=5 // pred_region
        %s418 = ssub.s32 %s18, 2
        // Predicated region
        $region61: #{tpu_custom_call.1} parent=59 // pred_check
          %p419 = pneg %p152
        $region62: #{tpu_custom_call.1} parent=59 // pred_check_branch
          %421 = sbr.rel (%p419) target = $region64
        $region63: #{tpu_custom_call.1} parent=59 // pred_region
          %s422 = sand.u32 %s137, 1
          %s423 = scalar_lea.sflag [#allocation8], %s422
          %s424 = sand.u32 %s137, 1
          %s425 = smul.addr %s424, 8
          %s426 = scalar_lea.vmem [#allocation12], %s425
          %428 = dma.done %s423, 128
        $region64: #{tpu_custom_call.1} parent=59 // pred_fallthru
          _
      $region60: #{tpu_custom_call.1} parent=5 // pred_fallthru
        _
    $region6: #{tpu_custom_call.1} parent=1 // loop_footer
      %s22 = sadd.s32 1, %s18
    $region7: #{tpu_custom_call.1} parent=1 // loop_footer_branch
      %17 = sbr.rel target = $region3
    $region8: #{tpu_custom_call.1} parent=1 // loop_exit
      _
    %429 = vsyncpa [#allocation7], 1
    %s430 = scalar_lea.sflag [#allocation7], 1
    %431 = vsyncpa %s430, 1
    %432 = vsyncpa [#allocation10], 1
    %s433 = scalar_lea.sflag [#allocation10], 1
    %434 = vsyncpa %s433, 1
    %435 = vsyncpa [#allocation8], 1
    %s436 = scalar_lea.sflag [#allocation8], 1
    %437 = vsyncpa %s436, 1

</llo_original>
